<compile_context>
chip_gen: v7x
topology: tpu7x:2x2x1
jax: 0.10.0
libtpu: 0.0.40
codegen_flags: <defaults>
</compile_context>

<pallas_src>
import jax
import jax.numpy as jnp
from jax.experimental import pallas as pl
from jax.experimental.pallas import tpu as pltpu


_LANE = 128
_SUBLANE = 8


def _round_up(n, m):
    return ((n + m - 1) // m) * m


def _cdiv(a, b):
    return (a + b - 1) // b


def prepare_hidden_output_params(weight, bias):
    """One-time param prep (hoisted out of the per-call hot path).

    weight: (H, F) float32 -- PyTorch nn.Linear layout (out_features, in_features)
    bias:   (H,)   float32

    Returns (w_t, b_row, H):
      w_t   (F, Hp)  weight, zero-padded on the out dim to a multiple of 128
                     and pre-transposed to (K, N) so the MXU is fed directly.
      b_row (1, Hp)  zero-padded bias row.
    """
    H, F = weight.shape
    Hp = _round_up(H, _LANE)
    w_t = jnp.pad(weight, ((0, Hp - H), (0, 0))).T         # (F, Hp)
    b_row = jnp.pad(bias, (0, Hp - H)).reshape(1, Hp)       # (1, Hp)
    return w_t, b_row, H


def _linear_kernel(x_ref, w_ref, b_ref, o_ref):
    # x_ref: (TB, F)  streamed input tile
    # w_ref: (F, Hp)  resident weight, already (K, N) layout for the MXU
    # b_ref: (1, Hp)  resident bias row (zero-padded to lane width)
    # o_ref: (TB, Hp) lane-dense output tile
    acc = jnp.dot(x_ref[...], w_ref[...], preferred_element_type=jnp.float32)
    o_ref[...] = (acc + b_ref[...]).astype(o_ref.dtype)


def hidden_output_forward(x, w_t, b_row, num_hidden, *, flatten=False,
                          block_batch=2048, trim=True, out_dtype=None):
    """Forward of HiddenOutput(model, layer=-1): a single Linear layer.

    x:          (B, F) input batch.
    w_t, b_row: prepared params from prepare_hidden_output_params().
    num_hidden: true H (un-padded out_features), used to trim the result.
    trim:       if False, return the lane-padded (B, Hp) slab (lets a fused
                consumer skip an extra full-output HBM pass).
    out_dtype:  e.g. jnp.bfloat16 to halve output HBM traffic (f32 accumulate).
    """
    if flatten:
        # nn.Flatten(): keep batch dim, flatten the rest (glue, not hot path).
        x = x.reshape(x.shape[0], -1)

    B, F = x.shape
    Fw, Hp = w_t.shape
    assert F == Fw, "feature dim of x does not match prepared weight"
    out_dtype = x.dtype if out_dtype is None else jnp.dtype(out_dtype)

    # --- batch tile ----------------------------------------------------------
    # Big tiles amortize the ~0.35us per-grid-step overhead; cap so there are
    # at least 2 grid steps (v7x megacore: "parallel" shards across both TCs)
    # whenever the batch allows it.
    TB = min(block_batch, max(_SUBLANE, _round_up(_cdiv(B, 2), _SUBLANE)))

    # Clamp against a conservative VMEM budget (double-buffered x/out tiles in
    # their lane-padded layouts + resident W/b).  12 MiB is safe under v5e's
    # 16 MiB scoped default and far under v7x's 64 MiB physical.
    def _vmem_bytes(tb):
        x_buf = 2 * tb * _round_up(F, _LANE) * x.dtype.itemsize
        o_buf = 2 * tb * Hp * out_dtype.itemsize
        w_buf = _round_up(F, _SUBLANE) * Hp * w_t.dtype.itemsize + Hp * 4
        return x_buf + o_buf + w_buf

    VMEM_BUDGET = 12 * 1024 * 1024
    while TB > _SUBLANE and _vmem_bytes(TB) > VMEM_BUDGET:
        TB = max(_SUBLANE, _round_up(TB // 2, _SUBLANE))

    grid = (_cdiv(B, TB),)

    cost = pl.CostEstimate(
        flops=2 * B * F * Hp,
        transcendentals=0,
        bytes_accessed=(B * F * x.dtype.itemsize
                        + F * Hp * w_t.dtype.itemsize
                        + Hp * b_row.dtype.itemsize
                        + B * Hp * out_dtype.itemsize),
    )

    out = pl.pallas_call(
        _linear_kernel,
        out_shape=jax.ShapeDtypeStruct((B, Hp), out_dtype),
        grid_spec=pltpu.PrefetchScalarGridSpec(
            num_scalar_prefetch=0,
            grid=grid,
            in_specs=[
                pl.BlockSpec((TB, F), lambda i: (i, 0)),   # streamed x tiles
                pl.BlockSpec((F, Hp), lambda i: (0, 0)),   # resident weight (K, N)
                pl.BlockSpec((1, Hp), lambda i: (0, 0)),   # resident bias row
            ],
            out_specs=pl.BlockSpec((TB, Hp), lambda i: (i, 0)),
        ),
        compiler_params=pltpu.CompilerParams(
            # batch tiles are independent -> shard across TCs on v7x megacore
            dimension_semantics=("parallel",),
        ),
        cost_estimate=cost,
    )(x, w_t, b_row)

    # trim=False hands the lane-padded slab to the consumer (e.g. a fused MMD
    # kernel) and avoids an extra full-output HBM round trip.
    return out[:, :num_hidden] if trim else out


if __name__ == "__main__":
    # Shapes consistent with the test: n_features=10, hidden=20.
    # B=40 gives 2 batch tiles (TB=24) -> exercises multi-tile streaming,
    # megacore-friendly grid, and a partial last block.
    B, F, H = 40, 10, 20

    key = jax.random.PRNGKey(0)
    kx, kw, kb = jax.random.split(key, 3)

    # Deterministic parameter init mimicking nn.Linear (uniform in +-1/sqrt(fan_in)).
    bound = 1.0 / (F ** 0.5)
    weight = jax.random.uniform(kw, (H, F), jnp.float32, minval=-bound, maxval=bound)
    bias = jax.random.uniform(kb, (H,), jnp.float32, minval=-bound, maxval=bound)
    x = jax.random.normal(kx, (B, F), jnp.float32)

    # One-time pad + transpose of the params (hoisted out of the forward path).
    w_t, b_row, num_hidden = prepare_hidden_output_params(weight, bias)

    y = hidden_output_forward(x, w_t, b_row, num_hidden, flatten=False)
    y = jax.block_until_ready(y)

    # Pure-JAX reference check of the HiddenOutput forward (dense1 only).
    y_ref = x @ weight.T + bias
    assert y.shape == (B, H)
    assert jnp.allclose(y, y_ref, atol=1e-5, rtol=1e-5)

    print("KERNEL_OK")
</pallas_src>

<mosaic_0001>
module attributes {stable_mosaic.version = 11 : i64} {
  func.func @_linear_kernel(%arg0: i32, %arg1: memref<24x10xf32, #tpu.memory_space<vmem>>, %arg2: memref<10x128xf32, #tpu.memory_space<vmem>>, %arg3: memref<1x128xf32, #tpu.memory_space<vmem>>, %arg4: memref<24x128xf32, #tpu.memory_space<vmem>>) attributes {dimension_semantics = [#tpu.dimension_semantics<parallel>], iteration_bounds = array<i64: 2>, scalar_prefetch = 0 : i64, scratch_operands = 0 : i64, tpu.core_type = #tpu.core_type<tc>, window_params = [{transform_indices = @transform_0, window_bounds = array<i64: 24, 10>}, {pipeline_mode = #tpu.pipeline_mode<synchronous>, transform_indices = @transform_1, window_bounds = array<i64: 10, 128>}, {pipeline_mode = #tpu.pipeline_mode<synchronous>, transform_indices = @transform_2, window_bounds = array<i64: 1, 128>}, {transform_indices = @transform_3, window_bounds = array<i64: 24, 128>}]} {
    %c0 = arith.constant 0 : index
    %c0_0 = arith.constant 0 : index
    %0 = vector.load %arg1[%c0, %c0_0] : memref<24x10xf32, #tpu.memory_space<vmem>>, vector<24x10xf32>
    %c0_1 = arith.constant 0 : index
    %c0_2 = arith.constant 0 : index
    %1 = vector.load %arg2[%c0_1, %c0_2] : memref<10x128xf32, #tpu.memory_space<vmem>>, vector<10x128xf32>
    %cst = arith.constant dense<0.000000e+00> : vector<24x128xf32>
    %2 = tpu.matmul %0, %1, %cst {dimension_numbers = #tpu.dot_dimension_numbers<[1], [0], [0], [1], [0, 0, 1, 1], [], []>} : vector<24x10xf32>, vector<10x128xf32>, vector<24x128xf32> -> vector<24x128xf32>
    %c0_3 = arith.constant 0 : index
    %c0_4 = arith.constant 0 : index
    %3 = vector.load %arg3[%c0_3, %c0_4] : memref<1x128xf32, #tpu.memory_space<vmem>>, vector<1x128xf32>
    %4 = vector.broadcast %3 : vector<1x128xf32> to vector<24x128xf32>
    %5 = arith.addf %2, %4 : vector<24x128xf32>
    %c0_5 = arith.constant 0 : index
    %c0_6 = arith.constant 0 : index
    %6 = vector.load %arg4[%c0_5, %c0_6] : memref<24x128xf32, #tpu.memory_space<vmem>>, vector<24x128xf32>
    tpu.vector_store %arg4[%c0_5, %c0_6], %5 {strides = array<i32>} : memref<24x128xf32, #tpu.memory_space<vmem>>, vector<24x128xf32>,
    return
  }
  func.func @transform_0(%arg0: i32) -> (i32, i32) {
    %c0_i32 = arith.constant 0 : i32
    %c0_i32_0 = arith.constant 0 : i32
    return %arg0, %c0_i32 : i32, i32
  }
  func.func @transform_1(%arg0: i32) -> (i32, i32) {
    %c0_i32 = arith.constant 0 : i32
    %c0_i32_0 = arith.constant 0 : i32
    %c0_i32_1 = arith.constant 0 : i32
    return %c0_i32, %c0_i32_0 : i32, i32
  }
  func.func @transform_2(%arg0: i32) -> (i32, i32) {
    %c0_i32 = arith.constant 0 : i32
    %c0_i32_0 = arith.constant 0 : i32
    %c0_i32_1 = arith.constant 0 : i32
    return %c0_i32, %c0_i32_0 : i32, i32
  }
  func.func @transform_3(%arg0: i32) -> (i32, i32) {
    %c0_i32 = arith.constant 0 : i32
    %c0_i32_0 = arith.constant 0 : i32
    return %arg0, %c0_i32 : i32, i32
  }
}

</mosaic_0001>

<llo_original>
// kernel: tpu_custom_call.1
$region0: #{tpu_custom_call.1}
  #allocation0 [shape = 'u32[]', space=smem, size = 0x4, offset = 0x4, fixed_abs, tag = 'smem constant byte address 0x4 - core index']
  #allocation1 [shape = 'u32[144,128]{1,0:T(1,128)}', space=vmem, size = 0x12000, scoped, tag = 'internal scratch']
  %s0 = inlined_call_operand.vmem [shape: f32[40,10], index: 0, kind: input, shape index: {}]
  %s1 = inlined_call_operand.vmem [shape: f32[10,128], index: 1, kind: input, shape index: {}]
  %s2 = inlined_call_operand.vmem [shape: f32[1,128], index: 2, kind: input, shape index: {}]
  %s3 = inlined_call_operand.hbm [shape: f32[40,128], index: 3, kind: output, shape index: {}]
  %s4 = sld [smem:[#allocation0]]
  $region45: #{tpu_custom_call.1} parent=0
    _
  %s6 = ssub.s32 1, %s4
  %s7 = scalar_select 0, %s6, %s4
  $region1: #{tpu_custom_call.1} parent=0
    #allocation2 [shape = 'u8[24576]{0}', space=vmem, size = 0x6000, scoped, tag = 'output window, operand 0']
    #allocation3 [shape = 's32[2]{0}', space=sflag, size = 0x8, scoped, tag = 'scoped memory for tpu_custom_call.1']
    %8 = vsyncpa [#allocation3], 0
    %s9 = scalar_lea.sflag [#allocation3], 1
    %10 = vsyncpa %s9, 0
    loop: start=0, step=1, limit=4
    $region2: #{tpu_custom_call.1} parent=1 // loop_pre_header
      _
    $region3: #{tpu_custom_call.1} parent=1 // loop_header
      %s12 = sphi 0, %s16
      %p13 = scmp.ge.s32.totalorder %s12, 4
      %s22 = sphi 0, %s24
      %s25 = sphi 0, %s22
      %s26 = sphi 0, %s25
      %s42 = sphi 0, %s26
      %s46 = sphi 0, %s46
      %s48 = sphi 0, %s46
      %s49 = sphi 0, %s48
      %s63 = sphi 0, %s49
      %s67 = sphi 0, %s67
      %s69 = sphi 0, %s67
      %s70 = sphi 0, %s69
      %s84 = sphi 0, %s70
      %s90 = sphi 0, %s92
      %s93 = sphi 0, %s90
      %s94 = sphi 0, %s93
      %s110 = sphi 0, %s94
    $region4: #{tpu_custom_call.1} parent=1 // loop_header_branch
      %15 = sbr.rel (%p13) target = $region8
    $region5: #{tpu_custom_call.1} parent=1 // loop_body
      %s17 = ssub.s32 %s12, 1
      %s18 = ssub.s32 %s12, 2
      %s19 = sadd.s32 %s12, 1
      %s20 = ssub.s32 %s12, %s19
      %p21 = scmp.eq.s32.totalorder %s20, 0
      %s23 = sadd.s32 %s22, 1
      %s24 = scalar_select %p21, %s22, %s23
      %p27 = pneg %p21
      %p28 = scmp.eq.s32.totalorder %s12, 1
      %p29 = por %p27, %p28
      %p30 = scmp.ne.s32.totalorder %s22, %s25
      %p31 = scmp.eq.s32.totalorder %s12, 0
      %p32 = por %p30, %p31
      %p33 = scmp.ne.s32.totalorder %s22, %s25
      %p34 = scmp.eq.s32.totalorder %s17, 1
      %p35 = por %p33, %p34
      %p36 = scmp.ne.s32.totalorder %s25, %s26
      %p37 = scmp.eq.s32.totalorder %s17, 0
      %p38 = por %p36, %p37
      %p39 = scmp.ne.s32.totalorder %s25, %s26
      %p40 = scmp.eq.s32.totalorder %s18, 1
      %p41 = por %p39, %p40
      %p43 = scmp.ne.s32.totalorder %s26, %s42
      %p44 = scmp.eq.s32.totalorder %s18, 0
      %p45 = por %p43, %p44
      %s47 = sadd.s32 %s46, 1
      %p50 = scmp.eq.s32.totalorder %s12, 1
      %p51 = scmp.ne.s32.totalorder %s46, %s48
      %p52 = scmp.eq.s32.totalorder %s12, 0
      %p53 = por %p51, %p52
      %p54 = scmp.ne.s32.totalorder %s46, %s48
      %p55 = scmp.eq.s32.totalorder %s17, 1
      %p56 = por %p54, %p55
      %p57 = scmp.ne.s32.totalorder %s48, %s49
      %p58 = scmp.eq.s32.totalorder %s17, 0
      %p59 = por %p57, %p58
      %p60 = scmp.ne.s32.totalorder %s48, %s49
      %p61 = scmp.eq.s32.totalorder %s18, 1
      %p62 = por %p60, %p61
      %p64 = scmp.ne.s32.totalorder %s49, %s63
      %p65 = scmp.eq.s32.totalorder %s18, 0
      %p66 = por %p64, %p65
      %s68 = sadd.s32 %s67, 1
      %p71 = scmp.eq.s32.totalorder %s12, 1
      %p72 = scmp.ne.s32.totalorder %s67, %s69
      %p73 = scmp.eq.s32.totalorder %s12, 0
      %p74 = por %p72, %p73
      %p75 = scmp.ne.s32.totalorder %s67, %s69
      %p76 = scmp.eq.s32.totalorder %s17, 1
      %p77 = por %p75, %p76
      %p78 = scmp.ne.s32.totalorder %s69, %s70
      %p79 = scmp.eq.s32.totalorder %s17, 0
      %p80 = por %p78, %p79
      %p81 = scmp.ne.s32.totalorder %s69, %s70
      %p82 = scmp.eq.s32.totalorder %s18, 1
      %p83 = por %p81, %p82
      %p85 = scmp.ne.s32.totalorder %s70, %s84
      %p86 = scmp.eq.s32.totalorder %s18, 0
      %p87 = por %p85, %p86
      %s88 = ssub.s32 %s12, %s19
      %p89 = scmp.eq.s32.totalorder %s88, 0
      %s91 = sadd.s32 %s90, 1
      %s92 = scalar_select %p89, %s90, %s91
      %p95 = pneg %p89
      %p96 = scmp.eq.s32.totalorder %s12, 1
      %p97 = por %p95, %p96
      %p98 = scmp.ne.s32.totalorder %s90, %s93
      %p99 = scmp.eq.s32.totalorder %s12, 0
      %p100 = por %p98, %p99
      %p101 = scmp.ne.s32.totalorder %s90, %s93
      %p102 = scmp.eq.s32.totalorder %s17, 1
      %p103 = por %p101, %p102
      %p104 = scmp.ne.s32.totalorder %s93, %s94
      %p105 = scmp.eq.s32.totalorder %s17, 0
      %p106 = por %p104, %p105
      %p107 = scmp.ne.s32.totalorder %s93, %s94
      %p108 = scmp.eq.s32.totalorder %s18, 1
      %p109 = por %p107, %p108
      %p111 = scmp.ne.s32.totalorder %s94, %s110
      %p112 = scmp.eq.s32.totalorder %s18, 0
      %p113 = por %p111, %p112
      %p114 = scmp.le.s32.totalorder 1, %s12
      %p115 = scmp.lt.s32.totalorder %s12, 3
      %p116 = pnand %p114, %p115
      %p117 = pneg %p116
      // Predicated region
      $region9: #{tpu_custom_call.1} parent=5 // pred_check
        _
      $region10: #{tpu_custom_call.1} parent=5 // pred_check_branch
        %119 = sbr.rel (%p116) target = $region12
      $region11: #{tpu_custom_call.1} parent=5 // pred_region
        %s120 = ssub.s32 %s12, 1
        // Predicated region
        $region13: #{tpu_custom_call.1} parent=11 // pred_check
          %p121 = pneg %p59
        $region14: #{tpu_custom_call.1} parent=11 // pred_check_branch
          %123 = sbr.rel (%p121) target = $region16
        $region15: #{tpu_custom_call.1} parent=11 // pred_region
          _
        $region16: #{tpu_custom_call.1} parent=11 // pred_fallthru
          _
        // Predicated region
        $region17: #{tpu_custom_call.1} parent=11 // pred_check
          %p124 = pneg %p80
        $region18: #{tpu_custom_call.1} parent=11 // pred_check_branch
          %126 = sbr.rel (%p124) target = $region20
        $region19: #{tpu_custom_call.1} parent=11 // pred_region
          _
        $region20: #{tpu_custom_call.1} parent=11 // pred_fallthru
          _
      $region12: #{tpu_custom_call.1} parent=5 // pred_fallthru
        _
      %p127 = scmp.lt.s32.totalorder %s12, 2
      // Predicated region
      $region21: #{tpu_custom_call.1} parent=5 // pred_check
        %p128 = pneg %p127
      $region22: #{tpu_custom_call.1} parent=5 // pred_check_branch
        %130 = sbr.rel (%p128) target = $region24
      $region23: #{tpu_custom_call.1} parent=5 // pred_region
        // Predicated region
        $region25: #{tpu_custom_call.1} parent=23 // pred_check
          %p131 = pneg %p32
        $region26: #{tpu_custom_call.1} parent=23 // pred_check_branch
          %133 = sbr.rel (%p131) target = $region28
        $region27: #{tpu_custom_call.1} parent=23 // pred_region
          %s134 = smul.u32 3, %s12
          %s135 = ssub.s32 5, %s134
          %p136 = scmp.lt.s32.totalorder %s135, 3
          %s137 = scalar_select %p136, %s135, 3
          %s138 = smul.u32 128, %s137
          %p139 = scmp.lt.s32.totalorder %s134, 4
          %s140 = scalar_select %p139, %s134, 4
          %s141 = smul.addr %s140, 8
          %s142 = scalar_lea.vmem %s0, %s141
          %s143 = smul.u32 3, %s12
          %s144 = ssub.s32 5, %s143
          %p145 = scmp.lt.s32.totalorder %s144, 3
          %s146 = scalar_select %p145, %s144, 3
          %s147 = smul.u32 128, %s146
        $region28: #{tpu_custom_call.1} parent=23 // pred_fallthru
          _
      $region24: #{tpu_custom_call.1} parent=5 // pred_fallthru
        _
      %p148 = scmp.le.s32.totalorder 1, %s12
      %p149 = scmp.lt.s32.totalorder %s12, 3
      %p150 = pnand %p148, %p149
      %p151 = pneg %p150
      // Predicated region
      $region29: #{tpu_custom_call.1} parent=5 // pred_check
        _
      $region30: #{tpu_custom_call.1} parent=5 // pred_check_branch
        %153 = sbr.rel (%p150) target = $region32
      $region31: #{tpu_custom_call.1} parent=5 // pred_region
        %s154 = ssub.s32 %s12, 1
        %s155 = smul.u32 3, %s17
        %s156 = ssub.s32 5, %s155
        %p157 = scmp.lt.s32.totalorder %s156, 3
        %s158 = scalar_select %p157, %s156, 3
        %s159 = smul.u32 128, %s158
        %p160 = scmp.lt.s32.totalorder %s155, 4
        %s161 = scalar_select %p160, %s155, 4
        %s162 = smul.addr %s161, 8
        %s163 = scalar_lea.vmem %s0, %s162
        %p164 = pneg %p38
        %p165 = pneg %p35
        %p166 = pneg %p59
        %p167 = pneg %p56
        %p168 = pneg %p80
        %p169 = pneg %p77
        %p170 = pneg %p106
        %p171 = pneg %p103
        %s172 = sand.u32 %s93, 1
        %s173 = scalar_lea.sflag [#allocation3], %s172
        %s174 = sand.u32 %s93, 1
        %s175 = smul.addr %s174, 24
        %s176 = scalar_lea.vmem [#allocation2], %s175
        %s177 = smul.u32 3, %s17
        %s178 = ssub.s32 5, %s177
        %p179 = scmp.lt.s32.totalorder %s178, 3
        %s180 = scalar_select %p179, %s178, 3
        %s181 = smul.u32 128, %s180
        %p182 = scmp.lt.s32.totalorder %s177, 4
        %s183 = scalar_select %p182, %s177, 4
        %s184 = smul.addr %s183, 8
        %s185 = scalar_lea.vmem %s0, %s184
        %s186 = smul.u32 3, %s17
        %s187 = ssub.s32 5, %s186
        %p188 = scmp.lt.s32.totalorder %s187, 3
        %s189 = scalar_select %p188, %s187, 3
        %s190 = smul.u32 128, %s189
        %s191 = smul.u32 3, %s17
        %s192 = ssub.s32 5, %s191
        %p193 = scmp.lt.s32.totalorder %s192, 3
        %s194 = scalar_select %p193, %s192, 3
        %s195 = smul.u32 128, %s194
        %v196 = vld [vmem:[%s185] sm:$0xff]
        %v197 = vld [vmem:[%s185 + $0x8] sm:$0xff]
        %v198 = vld [vmem:[%s185 + $0x10] sm:$0xff]
        %v199 = vld [vmem:[%s1] sm:$0xff]
        %v200 = vld [vmem:[%s1 + $0x8] sm:$0x3]
        %v201 = vld [vmem:[%s2] sm:$0x1]
        %v203 = vlaneseq
        %v204 = vshrl.u32 %v203, 7
        %v205 = vsub.s32 0, %v204
        %v206 = vrot.slane %v201, %v205
        %vm208 = vcmask 80896
        %v210 = vsel %vm208, %v196, 0
        %v213 = vsel %vm208, %v197, 0
        %v216 = vsel %vm208, %v198, 0
        %vm218 = vcmask 1041408
        %v220 = vsel %vm218, %v200, 0
        %222 = vmatprep.subr.mxu0 0.0
        %223 = vmatpush1.msra.mxu0 %v199
        %224 = vmatprep.subr.mxu0 0.0
        %225 = vmatpush1.msra.mxu0 %v220
        %226 = vmatprep.subr.mxu0 0.0
        %227 = vmatpush1.msra.mxu0 0.0
        %228 = vmatprep.subr.mxu0 0.0
        %229 = vmatpush1.msra.mxu0 0.0
        %230 = vmatprep.subr.mxu0 0.0
        %231 = vmatpush1.msra.mxu0 0.0
        %232 = vmatprep.subr.mxu0 0.0
        %233 = vmatpush1.msra.mxu0 0.0
        %234 = vmatprep.subr.mxu0 0.0
        %235 = vmatpush1.msra.mxu0 0.0
        %236 = vmatprep.subr.mxu0 0.0
        %237 = vmatpush1.msra.mxu0 0.0
        %238 = vmatprep.subr.mxu0 0.0
        %239 = vmatpush1.msra.mxu0 0.0
        %240 = vmatprep.subr.mxu0 0.0
        %241 = vmatpush1.msra.mxu0 0.0
        %242 = vmatprep.subr.mxu0 0.0
        %243 = vmatpush1.msra.mxu0 0.0
        %244 = vmatprep.subr.mxu0 0.0
        %245 = vmatpush1.msra.mxu0 0.0
        %246 = vmatprep.subr.mxu0 0.0
        %247 = vmatpush1.msra.mxu0 0.0
        %248 = vmatprep.subr.mxu0 0.0
        %249 = vmatpush1.msra.mxu0 0.0
        %250 = vmatprep.subr.mxu0 0.0
        %251 = vmatpush1.msra.mxu0 0.0
        %252 = vmatprep.subr.mxu0 0.0
        %253 = vmatpush1.msra.mxu0 0.0
        %254 = vmatprep.subr.mxu0 0.0
        %255 = vmatpush1.msra.mxu0 0.0
        %256 = vmatprep.subr.mxu0 0.0
        %257 = vmatpush1.msra.mxu0 0.0
        %258 = vmatprep.subr.mxu0 0.0
        %259 = vmatpush1.msra.mxu0 0.0
        %260 = vmatprep.subr.mxu0 0.0
        %261 = vmatpush1.msra.mxu0 0.0
        %262 = vmatprep.subr.mxu0 0.0
        %263 = vmatpush1.msra.mxu0 0.0
        %264 = vmatprep.subr.mxu0 0.0
        %265 = vmatpush1.msra.mxu0 0.0
        %266 = vmatprep.subr.mxu0 0.0
        %267 = vmatpush1.msra.mxu0 0.0
        %268 = vmatprep.subr.mxu0 0.0
        %269 = vmatpush1.msra.mxu0 0.0
        %270 = vmatprep.subr.mxu0 0.0
        %271 = vmatpush1.msra.mxu0 0.0
        %272 = vmatprep.subr.mxu0 0.0
        %273 = vmatpush1.msra.mxu0 0.0
        %274 = vmatprep.subr.mxu0 0.0
        %275 = vmatpush1.msra.mxu0 0.0
        %276 = vmatprep.subr.mxu0 0.0
        %277 = vmatpush1.msra.mxu0 0.0
        %278 = vmatprep.subr.mxu0 0.0
        %279 = vmatpush1.msra.mxu0 0.0
        %280 = vmatprep.subr.mxu0 0.0
        %281 = vmatpush1.msra.mxu0 0.0
        %282 = vmatprep.subr.mxu0 0.0
        %283 = vmatpush1.msra.mxu0 0.0
        %284 = vmatprep.subr.mxu0 0.0
        %285 = vmatpush1.msra.mxu0 0.0
        %286 = vmatprep.mubr.f32.mxu0 0.0
        %287 = vmatmul.mubr.f32.gmra.mrb[0].mxu0 %v210
        %v288 = vpop.f32.mrb[0].mxu0
        %v289 = vadd.f32 %v206, %v288
        %v290 = vpop.f32.mrb[0].mxu0
        %291 = vmatprep.mubr.f32.mxu0 0.0
        %292 = vmatmul.mubr.f32.gmra.mrb[0].mxu0 %v213
        %v293 = vpop.f32.mrb[0].mxu0
        %v294 = vadd.f32 %v206, %v293
        %v295 = vpop.f32.mrb[0].mxu0
        %296 = vmatprep.mubr.f32.mxu0 0.0
        %297 = vmatmul.mubr.f32.gmra.mrb[0].mxu0 %v216
        %v298 = vpop.f32.mrb[0].mxu0
        %v299 = vadd.f32 %v206, %v298
        %v300 = vpop.f32.mrb[0].mxu0
        %301 = vdwg.mxu0
        %302 = vst [vmem:[%s176] sm:$0xff] %v289
        %303 = vst [vmem:[%s176 + $0x8] sm:$0xff] %v294
        %304 = vst [vmem:[%s176 + $0x10] sm:$0xff] %v299
        %s305 = sand.u32 %s93, 1
        %s306 = scalar_lea.sflag [#allocation3], %s305
        %s307 = sand.u32 %s93, 1
        %s308 = smul.addr %s307, 24
        %s309 = scalar_lea.vmem [#allocation2], %s308
        // Predicated region
        $region33: #{tpu_custom_call.1} parent=31 // pred_check
          %p310 = pneg %p103
        $region34: #{tpu_custom_call.1} parent=31 // pred_check_branch
          %312 = sbr.rel (%p310) target = $region36
        $region35: #{tpu_custom_call.1} parent=31 // pred_region
          %s313 = smul.u32 3, %s17
          %s314 = ssub.s32 5, %s313
          %p315 = scmp.lt.s32.totalorder %s314, 3
          %s316 = scalar_select %p315, %s314, 3
          %s317 = smul.u32 128, %s316
          %s319 = ssub.s32 384, %s317
          %320 = vsyncadd %s306, %s319
          %p321 = scmp.ne.s32.totalorder 0, %s317
          %s322 = smul.addr %s313, 128
          %s323 = scalar_lea.hbm %s3, %s322
          %s324 = smul.u32 8, %s316
          %s325 = sshll.u32 %s309, 4
          %s326 = int_to_ptr.vmem [resolvable:$true] %s325
          %s327 = sshll.u32 %s324, 4
          %331 = dma.vmem_to_hbm [thread:$0]  (%p321), %s326, %s327, %s323, %s306, 128, 128, 8
        $region36: #{tpu_custom_call.1} parent=31 // pred_fallthru
          _
      $region32: #{tpu_custom_call.1} parent=5 // pred_fallthru
        _
      %p332 = scmp.le.s32.totalorder 2, %s12
      // Predicated region
      $region37: #{tpu_custom_call.1} parent=5 // pred_check
        %p333 = pneg %p332
      $region38: #{tpu_custom_call.1} parent=5 // pred_check_branch
        %335 = sbr.rel (%p333) target = $region40
      $region39: #{tpu_custom_call.1} parent=5 // pred_region
        %s336 = ssub.s32 %s12, 2
        // Predicated region
        $region41: #{tpu_custom_call.1} parent=39 // pred_check
          %p337 = pneg %p109
        $region42: #{tpu_custom_call.1} parent=39 // pred_check_branch
          %339 = sbr.rel (%p337) target = $region44
        $region43: #{tpu_custom_call.1} parent=39 // pred_region
          %s340 = sand.u32 %s94, 1
          %s341 = scalar_lea.sflag [#allocation3], %s340
          %s342 = sand.u32 %s94, 1
          %s343 = smul.addr %s342, 24
          %s344 = scalar_lea.vmem [#allocation2], %s343
          %345 = dma.done %s341, 384
        $region44: #{tpu_custom_call.1} parent=39 // pred_fallthru
          _
      $region40: #{tpu_custom_call.1} parent=5 // pred_fallthru
        _
    $region6: #{tpu_custom_call.1} parent=1 // loop_footer
      %s16 = sadd.s32 1, %s12
    $region7: #{tpu_custom_call.1} parent=1 // loop_footer_branch
      %11 = sbr.rel target = $region3
    $region8: #{tpu_custom_call.1} parent=1 // loop_exit
      _
    %346 = vsyncpa [#allocation3], 1
    %s347 = scalar_lea.sflag [#allocation3], 1
    %348 = vsyncpa %s347, 1

</llo_original>
